<compile_context>
chip_gen: v6e
topology: v6e:2x2x1
jax: 0.10.0
libtpu: 0.0.40
codegen_flags: <defaults>
</compile_context>

<pallas_src>
import functools
import math

import jax
import jax.numpy as jnp
from jax.experimental import pallas as pl
from jax.experimental.pallas import tpu as pltpu

_LANE = 128
_SUBLANE = 8


def _round_up(x, m):
    return ((x + m - 1) // m) * m


# --------------------------------------------------------------------------- #
# Kernels
# --------------------------------------------------------------------------- #

def _kernel_single_k(seed_ref, x_ref, w_enc_ref, w_cls_ref, b_cls_ref, o_ref,
                     *, training, dropout_threshold):
    """Whole reduction axis resident: one fused step per batch tile.

    seed_ref:  SMEM (1,) int32      dropout seed (scalar prefetch)
    x_ref:     VMEM [BM, Fp] f32    flattened image tile (cast in-kernel)
    w_enc_ref: VMEM [Fp, Dp] bf16   frozen-encoder weight (resident)
    w_cls_ref: VMEM [Dp, Cp] bf16   classifier weight (padded, scale folded)
    b_cls_ref: VMEM [1, Cp]  f32    classifier bias (padded)
    o_ref:     VMEM [BM, Cp] f32    logits tile (lane-dense)
    """
    bt = pl.program_id(0)                     # hoisted; only for dropout seed
    x = x_ref[...].astype(w_enc_ref.dtype)    # bf16 operands, f32 MXU accumulate
    h = jnp.dot(x, w_enc_ref[...], preferred_element_type=jnp.float32)
    h = jnp.maximum(h, 0.0)                   # ReLU in f32 (no bf16 VPU on v5e)
    if training:
        # nn.Dropout: keep-mask from the HW PRNG; the 1/(1-p) scale is folded
        # into w_cls host-side so the epilogue is a single select per element.
        pltpu.prng_seed(seed_ref[0] + bt)
        bits = pltpu.bitcast(pltpu.prng_random_bits(h.shape), jnp.uint32)
        h = jnp.where(bits >= jnp.uint32(dropout_threshold), h, 0.0)
    logits = jnp.dot(h.astype(w_cls_ref.dtype), w_cls_ref[...],
                     preferred_element_type=jnp.float32)
    o_ref[...] = logits + b_cls_ref[...]


def _kernel_tiled_k(seed_ref, x_ref, w_enc_ref, w_cls_ref, b_cls_ref, o_ref,
                    acc_ref, *, training, dropout_threshold):
    """(batch_tile, k_tile) grid; f32 latent accumulator resident across K."""
    bt = pl.program_id(0)                     # hoisted OUT of the pl.when bodies
    k = pl.program_id(1)

    @pl.when(k == 0)
    def _init():
        acc_ref[...] = jnp.zeros_like(acc_ref)

    acc_ref[...] += jnp.dot(x_ref[...].astype(w_enc_ref.dtype), w_enc_ref[...],
                            preferred_element_type=jnp.float32)

    @pl.when(k == pl.num_programs(1) - 1)
    def _finalize():
        h = jnp.maximum(acc_ref[...], 0.0)
        if training:
            pltpu.prng_seed(seed_ref[0] + bt)
            bits = pltpu.bitcast(pltpu.prng_random_bits(h.shape), jnp.uint32)
            h = jnp.where(bits >= jnp.uint32(dropout_threshold), h, 0.0)
        logits = jnp.dot(h.astype(w_cls_ref.dtype), w_cls_ref[...],
                         preferred_element_type=jnp.float32)
        o_ref[...] = logits + b_cls_ref[...]


# --------------------------------------------------------------------------- #
# Module wrapper
# --------------------------------------------------------------------------- #

class ImageLatentsClassifierTPU:
    """Pallas forward for ImageLatentsClassifier.

    Frozen-weight padding / bf16 casting is done ONCE here, not per call.
    `training` mirrors nn.Module.train()/eval(): dropout is identity in eval.
    NOTE: the caller must supply a fresh `seed` per training step; masks depend
    only on (seed + batch-tile index).
    """

    def __init__(self, w_enc, w_cls, b_cls, *, training=False, dropout_prob=0.3,
                 block_m=256, block_k=1024):
        if not (0.0 <= dropout_prob < 1.0):
            raise ValueError("dropout_prob must be in [0, 1)")
        self.training = bool(training) and dropout_prob > 0.0
        self.dropout_prob = float(dropout_prob)
        self.block_m = int(block_m)

        F, D = w_enc.shape
        D2, C = w_cls.shape
        assert D2 == D and b_cls.shape == (C,)
        self.F, self.D, self.C = F, D, C

        self.Dp = _round_up(D, _LANE)
        # Lane-dense output; pad to 256 for wide heads (v6e/v7x 2x256x256 MXU).
        self.Cp = _round_up(C, 256) if C > _LANE else _LANE

        # ---- K-axis layout (decided once; weights are frozen) --------------
        F128 = _round_up(F, _LANE)
        # Whole-reduction-resident when the encoder weight + a full-width x
        # tile fit comfortably (v7x has only 64 MiB VMEM).
        self.single_k = (F128 * self.Dp * 2 + 2 * self.block_m * F128 * 4
                         <= 24 * 1024 * 1024)
        if self.single_k:
            BK = F128
        else:
            BK = min(_round_up(block_k, _LANE), F128)
            # Shrink BK until the estimated working set fits a v7x-safe budget.
            def need(bk):
                return (2 * self.block_m * bk * 4 + 2 * bk * self.Dp * 2
                        + 2 * self.Dp * self.Cp * 2
                        + 2 * self.block_m * self.Cp * 4
                        + self.block_m * self.Dp * 4)
            while need(BK) > 48 * 1024 * 1024 and BK > _LANE:
                BK = max(_LANE, _round_up(BK // 2, _LANE))
        self.BK = BK
        self.Fp = _round_up(F, BK)

        # ---- one-time weight pad + bf16 cast --------------------------------
        w_cls_f32 = jnp.asarray(w_cls, jnp.float32)
        if self.training:
            w_cls_f32 = w_cls_f32 * (1.0 / (1.0 - self.dropout_prob))
        self.w_enc_p = jnp.zeros((self.Fp, self.Dp), jnp.bfloat16).at[:F, :D].set(
            jnp.asarray(w_enc, jnp.float32).astype(jnp.bfloat16))
        self.w_cls_p = jnp.zeros((self.Dp, self.Cp), jnp.bfloat16).at[:D, :C].set(
            w_cls_f32.astype(jnp.bfloat16))
        self.b_p = jnp.zeros((1, self.Cp), jnp.float32).at[0, :C].set(
            jnp.asarray(b_cls, jnp.float32))

        self.dropout_threshold = min(int(self.dropout_prob * 4294967296.0),
                                     0xFFFFFFFF)

    def __call__(self, x_nchw, *, seed=0):
        B = x_nchw.shape[0]
        x_flat = x_nchw.reshape(B, -1)
        assert x_flat.shape[1] == self.F

        # Batch tile: don't blow a tiny batch up to a 256-row tile; split into
        # >=2 tiles when possible so v7x's 2nd TensorCore is not idle.
        B8 = _round_up(B, _SUBLANE)
        BM = min(self.block_m, B8)
        if B8 > _SUBLANE and B8 // BM < 2:
            BM = _round_up((B8 + 1) // 2, _SUBLANE)
        Bp = _round_up(B, BM)
        nb = Bp // BM

        Fp, Dp, Cp, BK = self.Fp, self.Dp, self.Cp, self.BK

        # Pad only when needed (x stays in its input dtype; cast happens in
        # the kernel -> no extra HBM pass for a padded bf16 copy).
        if (Bp, Fp) != (B, self.F):
            x_flat = jnp.pad(x_flat, ((0, Bp - B), (0, Fp - self.F)))
        seed_arr = jnp.asarray([seed], dtype=jnp.int32)

        if self.single_k:
            kernel = functools.partial(_kernel_single_k, training=self.training,
                                       dropout_threshold=self.dropout_threshold)
            grid = (nb,)
            in_specs = [
                pl.BlockSpec((BM, Fp), lambda i, s: (i, 0)),      # x
                pl.BlockSpec((Fp, Dp), lambda i, s: (0, 0)),      # w_enc resident
                pl.BlockSpec((Dp, Cp), lambda i, s: (0, 0)),      # w_cls
                pl.BlockSpec((1, Cp), lambda i, s: (0, 0)),       # bias
            ]
            out_spec = pl.BlockSpec((BM, Cp), lambda i, s: (i, 0))
            scratch = []
            dims = ("parallel",)
            w_enc_streams = 1
        else:
            kernel = functools.partial(_kernel_tiled_k, training=self.training,
                                       dropout_threshold=self.dropout_threshold)
            grid = (nb, Fp // BK)
            in_specs = [
                pl.BlockSpec((BM, BK), lambda i, k, s: (i, k)),   # x
                pl.BlockSpec((BK, Dp), lambda i, k, s: (k, 0)),   # w_enc
                pl.BlockSpec((Dp, Cp), lambda i, k, s: (0, 0)),   # w_cls
                pl.BlockSpec((1, Cp), lambda i, k, s: (0, 0)),    # bias
            ]
            out_spec = pl.BlockSpec((BM, Cp), lambda i, k, s: (i, 0))
            scratch = [pltpu.VMEM((BM, Dp), jnp.float32)]         # latent acc
            dims = ("parallel", "arbitrary")
            w_enc_streams = nb          # re-streamed once per batch tile

        cost = pl.CostEstimate(
            flops=2 * Bp * Fp * Dp + 2 * Bp * Dp * Cp,
            transcendentals=0,
            bytes_accessed=int(Bp * Fp * 4
                               + w_enc_streams * Fp * Dp * 2
                               + Dp * Cp * 2 + Cp * 4 + Bp * Cp * 4),
        )

        # VMEM budget for THIS tiling (double-buffered streams, resident
        # constants, f32 accumulator), clamped to v7x's 64 MiB physical VMEM.
        vmem_need = (2 * BM * BK * 4
                     + (1 if self.single_k else 2) * BK * Dp * 2
                     + 2 * Dp * Cp * 2 + 2 * Cp * 4 + 2 * BM * Cp * 4
                     + (0 if self.single_k else BM * Dp * 4))
        vmem_limit = int(min(64 * 1024 * 1024,
                             max(32 * 1024 * 1024, 2 * vmem_need)))

        out = pl.pallas_call(
            kernel,
            out_shape=jax.ShapeDtypeStruct((Bp, Cp), jnp.float32),
            grid_spec=pltpu.PrefetchScalarGridSpec(
                num_scalar_prefetch=1,
                grid=grid,
                in_specs=in_specs,
                out_specs=out_spec,
                scratch_shapes=scratch,
            ),
            compiler_params=pltpu.CompilerParams(
                dimension_semantics=dims,
                vmem_limit_bytes=vmem_limit,
            ),
            cost_estimate=cost,
        )(seed_arr, x_flat, self.w_enc_p, self.w_cls_p, self.b_p)

        return out[:B, :self.C]


def _reference(x_nchw, w_enc, w_cls, b_cls):
    """Pure-JAX f32 reference (eval mode: dropout = identity)."""
    x = x_nchw.reshape(x_nchw.shape[0], -1).astype(jnp.float32)
    latents = x @ w_enc
    h = jnp.maximum(latents, 0.0)
    return h @ w_cls + b_cls[None, :]


if __name__ == "__main__":
    # Small shapes consistent with the module's forward.
    B, Cin, H, W = 2, 4, 16, 16      # NCHW image consumed by the frozen encoder
    latent_dim = 256
    num_classes = 16
    feat = Cin * H * W               # 1024

    key = jax.random.PRNGKey(0)
    k_x, k_enc, k_w, k_b = jax.random.split(key, 4)

    x = jax.random.normal(k_x, (B, Cin, H, W), dtype=jnp.float32)

    # Frozen trained_model stub weights (requires_grad=False -> constants).
    w_enc = jax.random.normal(k_enc, (feat, latent_dim),
                              dtype=jnp.float32) * (1.0 / math.sqrt(feat))

    # nn.Linear(latent_dim, num_classes) init: U(-1/sqrt(fan_in), 1/sqrt(fan_in)).
    bound = 1.0 / math.sqrt(latent_dim)
    w_cls = jax.random.uniform(k_w, (latent_dim, num_classes),
                               minval=-bound, maxval=bound, dtype=jnp.float32)
    b_cls = jax.random.uniform(k_b, (num_classes,),
                               minval=-bound, maxval=bound, dtype=jnp.float32)

    # Eval-mode forward (model.eval(): dropout is identity). Weight pad/cast
    # happens once in the constructor; the call only touches x + the kernel.
    model = ImageLatentsClassifierTPU(w_enc, w_cls, b_cls, training=False)
    out = model(x)
    out = jax.block_until_ready(out)

    ref = _reference(x, w_enc, w_cls, b_cls)
    assert out.shape == (B, num_classes)
    # bf16 operands / f32 accumulation -> loosened tolerance vs f32 reference.
    assert jnp.allclose(out, ref, atol=5e-2, rtol=5e-2), "mismatch vs reference"
    assert bool(jnp.all(jnp.isfinite(out)))

    print("KERNEL_OK")
</pallas_src>

<mosaic_0001>
module attributes {stable_mosaic.version = 11 : i64} {
  func.func @_kernel_single_k(%arg0: i32, %arg1: memref<1xi32, #tpu.memory_space<smem>>, %arg2: memref<8x1024xf32, #tpu.memory_space<vmem>>, %arg3: memref<1024x256xbf16, #tpu.memory_space<vmem>>, %arg4: memref<256x128xbf16, #tpu.memory_space<vmem>>, %arg5: memref<1x128xf32, #tpu.memory_space<vmem>>, %arg6: memref<8x128xf32, #tpu.memory_space<vmem>>) attributes {dimension_semantics = [#tpu.dimension_semantics<parallel>], iteration_bounds = array<i64: 1>, scalar_prefetch = 1 : i64, scratch_operands = 0 : i64, tpu.core_type = #tpu.core_type<tc>, window_params = [{transform_indices = @transform_0, window_bounds = array<i64: 8, 1024>}, {pipeline_mode = #tpu.pipeline_mode<synchronous>, transform_indices = @transform_1, window_bounds = array<i64: 1024, 256>}, {pipeline_mode = #tpu.pipeline_mode<synchronous>, transform_indices = @transform_2, window_bounds = array<i64: 256, 128>}, {pipeline_mode = #tpu.pipeline_mode<synchronous>, transform_indices = @transform_3, window_bounds = array<i64: 1, 128>}, {transform_indices = @transform_4, window_bounds = array<i64: 8, 128>}]} {
    %c0 = arith.constant 0 : index
    %c0_0 = arith.constant 0 : index
    %0 = vector.load %arg2[%c0, %c0_0] : memref<8x1024xf32, #tpu.memory_space<vmem>>, vector<8x1024xf32>
    %1 = arith.truncf %0 : vector<8x1024xf32> to vector<8x1024xbf16>
    %c0_1 = arith.constant 0 : index
    %c0_2 = arith.constant 0 : index
    %2 = vector.load %arg3[%c0_1, %c0_2] : memref<1024x256xbf16, #tpu.memory_space<vmem>>, vector<1024x256xbf16>
    %cst = arith.constant dense<0.000000e+00> : vector<8x256xf32>
    %3 = tpu.matmul %1, %2, %cst {dimension_numbers = #tpu.dot_dimension_numbers<[1], [0], [0], [1], [0, 0, 1, 1], [], []>} : vector<8x1024xbf16>, vector<1024x256xbf16>, vector<8x256xf32> -> vector<8x256xf32>
    %cst_3 = arith.constant 0.000000e+00 : f32
    %4 = vector.broadcast %cst_3 : f32 to vector<8x256xf32>
    %5 = arith.maximumf %3, %4 : vector<8x256xf32>
    %6 = arith.truncf %5 : vector<8x256xf32> to vector<8x256xbf16>
    %c0_4 = arith.constant 0 : index
    %c0_5 = arith.constant 0 : index
    %7 = vector.load %arg4[%c0_4, %c0_5] : memref<256x128xbf16, #tpu.memory_space<vmem>>, vector<256x128xbf16>
    %cst_6 = arith.constant dense<0.000000e+00> : vector<8x128xf32>
    %8 = tpu.matmul %6, %7, %cst_6 {dimension_numbers = #tpu.dot_dimension_numbers<[1], [0], [0], [1], [0, 0, 1, 1], [], []>} : vector<8x256xbf16>, vector<256x128xbf16>, vector<8x128xf32> -> vector<8x128xf32>
    %c0_7 = arith.constant 0 : index
    %c0_8 = arith.constant 0 : index
    %9 = vector.load %arg5[%c0_7, %c0_8] : memref<1x128xf32, #tpu.memory_space<vmem>>, vector<1x128xf32>
    %10 = vector.broadcast %9 : vector<1x128xf32> to vector<8x128xf32>
    %11 = arith.addf %8, %10 : vector<8x128xf32>
    %c0_9 = arith.constant 0 : index
    %c0_10 = arith.constant 0 : index
    %12 = vector.load %arg6[%c0_9, %c0_10] : memref<8x128xf32, #tpu.memory_space<vmem>>, vector<8x128xf32>
    tpu.vector_store %arg6[%c0_9, %c0_10], %11 {strides = array<i32>} : memref<8x128xf32, #tpu.memory_space<vmem>>, vector<8x128xf32>,
    return
  }
  func.func @transform_0(%arg0: i32, %arg1: memref<1xi32, #tpu.memory_space<smem>>) -> (i32, i32) {
    %c0_i32 = arith.constant 0 : i32
    %c0_i32_0 = arith.constant 0 : i32
    return %arg0, %c0_i32 : i32, i32
  }
  func.func @transform_1(%arg0: i32, %arg1: memref<1xi32, #tpu.memory_space<smem>>) -> (i32, i32) {
    %c0_i32 = arith.constant 0 : i32
    %c0_i32_0 = arith.constant 0 : i32
    %c0_i32_1 = arith.constant 0 : i32
    return %c0_i32, %c0_i32_0 : i32, i32
  }
  func.func @transform_2(%arg0: i32, %arg1: memref<1xi32, #tpu.memory_space<smem>>) -> (i32, i32) {
    %c0_i32 = arith.constant 0 : i32
    %c0_i32_0 = arith.constant 0 : i32
    %c0_i32_1 = arith.constant 0 : i32
    return %c0_i32, %c0_i32_0 : i32, i32
  }
  func.func @transform_3(%arg0: i32, %arg1: memref<1xi32, #tpu.memory_space<smem>>) -> (i32, i32) {
    %c0_i32 = arith.constant 0 : i32
    %c0_i32_0 = arith.constant 0 : i32
    %c0_i32_1 = arith.constant 0 : i32
    return %c0_i32, %c0_i32_0 : i32, i32
  }
  func.func @transform_4(%arg0: i32, %arg1: memref<1xi32, #tpu.memory_space<smem>>) -> (i32, i32) {
    %c0_i32 = arith.constant 0 : i32
    %c0_i32_0 = arith.constant 0 : i32
    return %arg0, %c0_i32 : i32, i32
  }
}

</mosaic_0001>

<llo_original>
// kernel: tpu_custom_call.1
$region0: #{tpu_custom_call.1}
  #allocation0 [shape = 'u32[]', space=smem, size = 0x4, offset = 0x4, fixed_abs, tag = 'smem constant byte address 0x4 - core index']
  #allocation1 [shape = 'u32[144,128]{1,0:T(1,128)}', space=vmem, size = 0x12000, scoped, tag = 'internal scratch']
  #allocation2 [shape = 's32[1]{0}', space=sflag, size = 0x4, scoped, tag = 'scoped memory for tpu_custom_call.1']
  #allocation3 [shape = 's32[1]{0:T(128)S(6)}', space=smem, size = 0x200, scoped, tag = 'prefetched SMEM operand 0']
  %s0 = inlined_call_operand.<no memory space> [shape: s32[1], index: 0, kind: input, shape index: {}]
  %s1 = inlined_call_operand.hbm [shape: f32[8,1024], index: 1, kind: input, shape index: {}]
  %s2 = inlined_call_operand.hbm [shape: bf16[1024,256], index: 2, kind: input, shape index: {}]
  %s3 = inlined_call_operand.hbm [shape: bf16[256,128], index: 3, kind: input, shape index: {}]
  %s4 = inlined_call_operand.vmem [shape: f32[1,128], index: 4, kind: input, shape index: {}]
  %s5 = inlined_call_operand.hbm [shape: f32[8,128], index: 5, kind: output, shape index: {}]
  %s6 = sld [smem:[#allocation0]]
  $region38: #{tpu_custom_call.1} parent=0
    _
  %s8 = ssub.s32 1, %s6
  %s9 = scalar_select 0, %s8, %s6
  %10 = sst [smem:[#allocation3]] %s0
  $region1: #{tpu_custom_call.1} parent=0
    #allocation4 [shape = 'u8[32768]{0}', space=vmem, size = 0x8000, scoped, tag = 'input window, operand 1, single buffered']
    #allocation5 [shape = 's32[1]{0}', space=sflag, size = 0x4, scoped, tag = 'scoped memory for tpu_custom_call.1']
    #allocation6 [shape = 's32[1]{0}', space=sflag, size = 0x4, scoped, tag = 'scoped memory for tpu_custom_call.1']
    #allocation7 [shape = 'u8[524288]{0}', space=vmem, size = 0x80000, scoped, tag = 'input window, operand 2, single buffered']
    #allocation8 [shape = 's32[1]{0}', space=sflag, size = 0x4, scoped, tag = 'scoped memory for tpu_custom_call.1']
    #allocation9 [shape = 'u8[65536]{0}', space=vmem, size = 0x10000, scoped, tag = 'input window, operand 3, single buffered']
    #allocation10 [shape = 'u8[4096]{0}', space=vmem, size = 0x1000, scoped, tag = 'output window, operand 0, single buffered']
    %11 = vsyncpa [#allocation5], 0
    %12 = vsyncpa [#allocation8], 0
    %13 = vsyncpa [#allocation6], 0
    // Predicated region
    $region2: #{tpu_custom_call.1} parent=1 // pred_check
      _
    $region3: #{tpu_custom_call.1} parent=1 // pred_check_branch
      %15 = sbr.rel (0) target = $region5
    $region4: #{tpu_custom_call.1} parent=1 // pred_region
      %s17 = ssub.s32 1024, 1024
      %18 = vsyncadd [#allocation5], %s17
      %s20 = sshll.u32 [#allocation4], 4
      %s21 = int_to_ptr.vmem [resolvable:$true] %s20
      %23 = dma.hbm_to_vmem [thread:$0]  %s1, 1024, %s21, [#allocation5]
    $region5: #{tpu_custom_call.1} parent=1 // pred_fallthru
      _
    // Predicated region
    $region6: #{tpu_custom_call.1} parent=1 // pred_check
      _
    $region7: #{tpu_custom_call.1} parent=1 // pred_check_branch
      %25 = sbr.rel (0) target = $region9
    $region8: #{tpu_custom_call.1} parent=1 // pred_region
      %s27 = ssub.s32 16384, 16384
      %28 = vsyncadd [#allocation8], %s27
      %s29 = sshll.u32 [#allocation7], 4
      %s30 = int_to_ptr.vmem [resolvable:$true] %s29
      %35 = dma.hbm_to_vmem [thread:$0]  %s2, 16384, %s30, [#allocation8], 128, 128, 8
    $region9: #{tpu_custom_call.1} parent=1 // pred_fallthru
      _
    // Predicated region
    $region10: #{tpu_custom_call.1} parent=1 // pred_check
      _
    $region11: #{tpu_custom_call.1} parent=1 // pred_check_branch
      %37 = sbr.rel (0) target = $region13
    $region12: #{tpu_custom_call.1} parent=1 // pred_region
      %s39 = ssub.s32 2048, 2048
      %40 = vsyncadd [#allocation8], %s39
      %s41 = sshll.u32 [#allocation9], 4
      %s42 = int_to_ptr.vmem [resolvable:$true] %s41
      %47 = dma.hbm_to_vmem [thread:$0]  %s3, 2048, %s42, [#allocation8], 64, 64, 4
    $region13: #{tpu_custom_call.1} parent=1 // pred_fallthru
      _
    // Predicated region
    $region14: #{tpu_custom_call.1} parent=1 // pred_check
      _
    $region15: #{tpu_custom_call.1} parent=1 // pred_check_branch
      %49 = sbr.rel (0) target = $region17
    $region16: #{tpu_custom_call.1} parent=1 // pred_region
      _
    $region17: #{tpu_custom_call.1} parent=1 // pred_fallthru
      _
    // Predicated region
    $region18: #{tpu_custom_call.1} parent=1 // pred_check
      _
    $region19: #{tpu_custom_call.1} parent=1 // pred_check_branch
      %51 = sbr.rel (0) target = $region21
    $region20: #{tpu_custom_call.1} parent=1 // pred_region
      %52 = dma.done [#allocation5], 1024
    $region21: #{tpu_custom_call.1} parent=1 // pred_fallthru
      _
    // Predicated region
    $region22: #{tpu_custom_call.1} parent=1 // pred_check
      _
    $region23: #{tpu_custom_call.1} parent=1 // pred_check_branch
      %54 = sbr.rel (0) target = $region25
    $region24: #{tpu_custom_call.1} parent=1 // pred_region
      %55 = dma.done [#allocation8], 16384
    $region25: #{tpu_custom_call.1} parent=1 // pred_fallthru
      _
    // Predicated region
    $region26: #{tpu_custom_call.1} parent=1 // pred_check
      _
    $region27: #{tpu_custom_call.1} parent=1 // pred_check_branch
      %57 = sbr.rel (0) target = $region29
    $region28: #{tpu_custom_call.1} parent=1 // pred_region
      %58 = dma.done [#allocation8], 2048
    $region29: #{tpu_custom_call.1} parent=1 // pred_fallthru
      _
    %v60 = vld [vmem:[#allocation4] sm:$0xff]
    %v61 = vld [vmem:[#allocation4 + $0x8] sm:$0xff]
    %v62 = vld [vmem:[#allocation4 + $0x10] sm:$0xff]
    %v63 = vld [vmem:[#allocation4 + $0x18] sm:$0xff]
    %v64 = vld [vmem:[#allocation4 + $0x20] sm:$0xff]
    %v65 = vld [vmem:[#allocation4 + $0x28] sm:$0xff]
    %v66 = vld [vmem:[#allocation4 + $0x30] sm:$0xff]
    %v67 = vld [vmem:[#allocation4 + $0x38] sm:$0xff]
    %v68 = vpack.c.bf16 %v60, %v60
    %v69 = vpack.c.bf16 %v61, %v61
    %v70 = vpack.c.bf16 %v62, %v62
    %v71 = vpack.c.bf16 %v63, %v63
    %v72 = vpack.c.bf16 %v64, %v64
    %v73 = vpack.c.bf16 %v65, %v65
    %v74 = vpack.c.bf16 %v66, %v66
    %v75 = vpack.c.bf16 %v67, %v67
    %v76 = vld [vmem:[#allocation7] sm:$0xff]
    %v77 = vld [vmem:[#allocation7 + $0x8] sm:$0xff]
    %v78 = vld [vmem:[#allocation7 + $0x10] sm:$0xff]
    %v79 = vld [vmem:[#allocation7 + $0x18] sm:$0xff]
    %v80 = vld [vmem:[#allocation7 + $0x20] sm:$0xff]
    %v81 = vld [vmem:[#allocation7 + $0x28] sm:$0xff]
    %v82 = vld [vmem:[#allocation7 + $0x30] sm:$0xff]
    %v83 = vld [vmem:[#allocation7 + $0x38] sm:$0xff]
    %v84 = vld [vmem:[#allocation7 + $0x40] sm:$0xff]
    %v85 = vld [vmem:[#allocation7 + $0x48] sm:$0xff]
    %v86 = vld [vmem:[#allocation7 + $0x50] sm:$0xff]
    %v87 = vld [vmem:[#allocation7 + $0x58] sm:$0xff]
    %v88 = vld [vmem:[#allocation7 + $0x60] sm:$0xff]
    %v89 = vld [vmem:[#allocation7 + $0x68] sm:$0xff]
    %v90 = vld [vmem:[#allocation7 + $0x70] sm:$0xff]
    %v91 = vld [vmem:[#allocation7 + $0x78] sm:$0xff]
    %v92 = vld [vmem:[#allocation7 + $0x80] sm:$0xff]
    %v93 = vld [vmem:[#allocation7 + $0x88] sm:$0xff]
    %v94 = vld [vmem:[#allocation7 + $0x90] sm:$0xff]
    %v95 = vld [vmem:[#allocation7 + $0x98] sm:$0xff]
    %v96 = vld [vmem:[#allocation7 + $0xa0] sm:$0xff]
    %v97 = vld [vmem:[#allocation7 + $0xa8] sm:$0xff]
    %v98 = vld [vmem:[#allocation7 + $0xb0] sm:$0xff]
    %v99 = vld [vmem:[#allocation7 + $0xb8] sm:$0xff]
    %v100 = vld [vmem:[#allocation7 + $0xc0] sm:$0xff]
    %v101 = vld [vmem:[#allocation7 + $0xc8] sm:$0xff]
    %v102 = vld [vmem:[#allocation7 + $0xd0] sm:$0xff]
    %v103 = vld [vmem:[#allocation7 + $0xd8] sm:$0xff]
    %v104 = vld [vmem:[#allocation7 + $0xe0] sm:$0xff]
    %v105 = vld [vmem:[#allocation7 + $0xe8] sm:$0xff]
    %v106 = vld [vmem:[#allocation7 + $0xf0] sm:$0xff]
    %v107 = vld [vmem:[#allocation7 + $0xf8] sm:$0xff]
    %v108 = vld [vmem:[#allocation7 + $0x100] sm:$0xff]
    %v109 = vld [vmem:[#allocation7 + $0x108] sm:$0xff]
    %v110 = vld [vmem:[#allocation7 + $0x110] sm:$0xff]
    %v111 = vld [vmem:[#allocation7 + $0x118] sm:$0xff]
    %v112 = vld [vmem:[#allocation7 + $0x120] sm:$0xff]
    %v113 = vld [vmem:[#allocation7 + $0x128] sm:$0xff]
    %v114 = vld [vmem:[#allocation7 + $0x130] sm:$0xff]
    %v115 = vld [vmem:[#allocation7 + $0x138] sm:$0xff]
    %v116 = vld [vmem:[#allocation7 + $0x140] sm:$0xff]
    %v117 = vld [vmem:[#allocation7 + $0x148] sm:$0xff]
    %v118 = vld [vmem:[#allocation7 + $0x150] sm:$0xff]
    %v119 = vld [vmem:[#allocation7 + $0x158] sm:$0xff]
    %v120 = vld [vmem:[#allocation7 + $0x160] sm:$0xff]
    %v121 = vld [vmem:[#allocation7 + $0x168] sm:$0xff]
    %v122 = vld [vmem:[#allocation7 + $0x170] sm:$0xff]
    %v123 = vld [vmem:[#allocation7 + $0x178] sm:$0xff]
    %v124 = vld [vmem:[#allocation7 + $0x180] sm:$0xff]
    %v125 = vld [vmem:[#allocation7 + $0x188] sm:$0xff]
    %v126 = vld [vmem:[#allocation7 + $0x190] sm:$0xff]
    %v127 = vld [vmem:[#allocation7 + $0x198] sm:$0xff]
    %v128 = vld [vmem:[#allocation7 + $0x1a0] sm:$0xff]
    %v129 = vld [vmem:[#allocation7 + $0x1a8] sm:$0xff]
    %v130 = vld [vmem:[#allocation7 + $0x1b0] sm:$0xff]
    %v131 = vld [vmem:[#allocation7 + $0x1b8] sm:$0xff]
    %v132 = vld [vmem:[#allocation7 + $0x1c0] sm:$0xff]
    %v133 = vld [vmem:[#allocation7 + $0x1c8] sm:$0xff]
    %v134 = vld [vmem:[#allocation7 + $0x1d0] sm:$0xff]
    %v135 = vld [vmem:[#allocation7 + $0x1d8] sm:$0xff]
    %v136 = vld [vmem:[#allocation7 + $0x1e0] sm:$0xff]
    %v137 = vld [vmem:[#allocation7 + $0x1e8] sm:$0xff]
    %v138 = vld [vmem:[#allocation7 + $0x1f0] sm:$0xff]
    %v139 = vld [vmem:[#allocation7 + $0x1f8] sm:$0xff]
    %v140 = vld [vmem:[#allocation7 + $0x200] sm:$0xff]
    %v141 = vld [vmem:[#allocation7 + $0x208] sm:$0xff]
    %v142 = vld [vmem:[#allocation7 + $0x210] sm:$0xff]
    %v143 = vld [vmem:[#allocation7 + $0x218] sm:$0xff]
    %v144 = vld [vmem:[#allocation7 + $0x220] sm:$0xff]
    %v145 = vld [vmem:[#allocation7 + $0x228] sm:$0xff]
    %v146 = vld [vmem:[#allocation7 + $0x230] sm:$0xff]
    %v147 = vld [vmem:[#allocation7 + $0x238] sm:$0xff]
    %v148 = vld [vmem:[#allocation7 + $0x240] sm:$0xff]
    %v149 = vld [vmem:[#allocation7 + $0x248] sm:$0xff]
    %v150 = vld [vmem:[#allocation7 + $0x250] sm:$0xff]
    %v151 = vld [vmem:[#allocation7 + $0x258] sm:$0xff]
    %v152 = vld [vmem:[#allocation7 + $0x260] sm:$0xff]
    %v153 = vld [vmem:[#allocation7 + $0x268] sm:$0xff]
    %v154 = vld [vmem:[#allocation7 + $0x270] sm:$0xff]
    %v155 = vld [vmem:[#allocation7 + $0x278] sm:$0xff]
    %v156 = vld [vmem:[#allocation7 + $0x280] sm:$0xff]
    %v157 = vld [vmem:[#allocation7 + $0x288] sm:$0xff]
    %v158 = vld [vmem:[#allocation7 + $0x290] sm:$0xff]
    %v159 = vld [vmem:[#allocation7 + $0x298] sm:$0xff]
    %v160 = vld [vmem:[#allocation7 + $0x2a0] sm:$0xff]
    %v161 = vld [vmem:[#allocation7 + $0x2a8] sm:$0xff]
    %v162 = vld [vmem:[#allocation7 + $0x2b0] sm:$0xff]
    %v163 = vld [vmem:[#allocation7 + $0x2b8] sm:$0xff]
    %v164 = vld [vmem:[#allocation7 + $0x2c0] sm:$0xff]
    %v165 = vld [vmem:[#allocation7 + $0x2c8] sm:$0xff]
    %v166 = vld [vmem:[#allocation7 + $0x2d0] sm:$0xff]
    %v167 = vld [vmem:[#allocation7 + $0x2d8] sm:$0xff]
    %v168 = vld [vmem:[#allocation7 + $0x2e0] sm:$0xff]
    %v169 = vld [vmem:[#allocation7 + $0x2e8] sm:$0xff]
    %v170 = vld [vmem:[#allocation7 + $0x2f0] sm:$0xff]
    %v171 = vld [vmem:[#allocation7 + $0x2f8] sm:$0xff]
    %v172 = vld [vmem:[#allocation7 + $0x300] sm:$0xff]
    %v173 = vld [vmem:[#allocation7 + $0x308] sm:$0xff]
    %v174 = vld [vmem:[#allocation7 + $0x310] sm:$0xff]
    %v175 = vld [vmem:[#allocation7 + $0x318] sm:$0xff]
    %v176 = vld [vmem:[#allocation7 + $0x320] sm:$0xff]
    %v177 = vld [vmem:[#allocation7 + $0x328] sm:$0xff]
    %v178 = vld [vmem:[#allocation7 + $0x330] sm:$0xff]
    %v179 = vld [vmem:[#allocation7 + $0x338] sm:$0xff]
    %v180 = vld [vmem:[#allocation7 + $0x340] sm:$0xff]
    %v181 = vld [vmem:[#allocation7 + $0x348] sm:$0xff]
    %v182 = vld [vmem:[#allocation7 + $0x350] sm:$0xff]
    %v183 = vld [vmem:[#allocation7 + $0x358] sm:$0xff]
    %v184 = vld [vmem:[#allocation7 + $0x360] sm:$0xff]
    %v185 = vld [vmem:[#allocation7 + $0x368] sm:$0xff]
    %v186 = vld [vmem:[#allocation7 + $0x370] sm:$0xff]
    %v187 = vld [vmem:[#allocation7 + $0x378] sm:$0xff]
    %v188 = vld [vmem:[#allocation7 + $0x380] sm:$0xff]
    %v189 = vld [vmem:[#allocation7 + $0x388] sm:$0xff]
    %v190 = vld [vmem:[#allocation7 + $0x390] sm:$0xff]
    %v191 = vld [vmem:[#allocation7 + $0x398] sm:$0xff]
    %v192 = vld [vmem:[#allocation7 + $0x3a0] sm:$0xff]
    %v193 = vld [vmem:[#allocation7 + $0x3a8] sm:$0xff]
    %v194 = vld [vmem:[#allocation7 + $0x3b0] sm:$0xff]
    %v195 = vld [vmem:[#allocation7 + $0x3b8] sm:$0xff]
    %v196 = vld [vmem:[#allocation7 + $0x3c0] sm:$0xff]
    %v197 = vld [vmem:[#allocation7 + $0x3c8] sm:$0xff]
    %v198 = vld [vmem:[#allocation7 + $0x3d0] sm:$0xff]
    %v199 = vld [vmem:[#allocation7 + $0x3d8] sm:$0xff]
    %v200 = vld [vmem:[#allocation7 + $0x3e0] sm:$0xff]
    %v201 = vld [vmem:[#allocation7 + $0x3e8] sm:$0xff]
    %v202 = vld [vmem:[#allocation7 + $0x3f0] sm:$0xff]
    %v203 = vld [vmem:[#allocation7 + $0x3f8] sm:$0xff]
    %v332 = vunpack.c.l.b16 %v76
    %v333 = vunpack.c.h.b16 %v76
    %v334 = vunpack.c.l.b16 %v77
    %v335 = vunpack.c.h.b16 %v77
    %v336 = vunpack.c.l.b16 %v78
    %v337 = vunpack.c.h.b16 %v78
    %v338 = vunpack.c.l.b16 %v79
    %v339 = vunpack.c.h.b16 %v79
    %v340 = vunpack.c.l.b16 %v80
    %v341 = vunpack.c.h.b16 %v80
    %v342 = vunpack.c.l.b16 %v81
    %v343 = vunpack.c.h.b16 %v81
    %v344 = vunpack.c.l.b16 %v82
    %v345 = vunpack.c.h.b16 %v82
    %v346 = vunpack.c.l.b16 %v83
    %v347 = vunpack.c.h.b16 %v83
    %v348 = vunpack.c.l.b16 %v84
    %v349 = vunpack.c.h.b16 %v84
    %v350 = vunpack.c.l.b16 %v85
    %v351 = vunpack.c.h.b16 %v85
    %v352 = vunpack.c.l.b16 %v86
    %v353 = vunpack.c.h.b16 %v86
    %v354 = vunpack.c.l.b16 %v87
    %v355 = vunpack.c.h.b16 %v87
    %v356 = vunpack.c.l.b16 %v88
    %v357 = vunpack.c.h.b16 %v88
    %v358 = vunpack.c.l.b16 %v89
    %v359 = vunpack.c.h.b16 %v89
    %v360 = vunpack.c.l.b16 %v90
    %v361 = vunpack.c.h.b16 %v90
    %v362 = vunpack.c.l.b16 %v91
    %v363 = vunpack.c.h.b16 %v91
    %v364 = vunpack.c.l.b16 %v92
    %v365 = vunpack.c.h.b16 %v92
    %v366 = vunpack.c.l.b16 %v93
    %v367 = vunpack.c.h.b16 %v93
    %v368 = vunpack.c.l.b16 %v94
    %v369 = vunpack.c.h.b16 %v94
    %v370 = vunpack.c.l.b16 %v95
    %v371 = vunpack.c.h.b16 %v95
    %v372 = vunpack.c.l.b16 %v96
    %v373 = vunpack.c.h.b16 %v96
    %v374 = vunpack.c.l.b16 %v97
    %v375 = vunpack.c.h.b16 %v97
    %v376 = vunpack.c.l.b16 %v98
    %v377 = vunpack.c.h.b16 %v98
    %v378 = vunpack.c.l.b16 %v99
    %v379 = vunpack.c.h.b16 %v99
    %v380 = vunpack.c.l.b16 %v100
    %v381 = vunpack.c.h.b16 %v100
    %v382 = vunpack.c.l.b16 %v101
    %v383 = vunpack.c.h.b16 %v101
    %v384 = vunpack.c.l.b16 %v102
    %v385 = vunpack.c.h.b16 %v102
    %v386 = vunpack.c.l.b16 %v103
    %v387 = vunpack.c.h.b16 %v103
    %v388 = vunpack.c.l.b16 %v104
    %v389 = vunpack.c.h.b16 %v104
    %v390 = vunpack.c.l.b16 %v105
    %v391 = vunpack.c.h.b16 %v105
    %v392 = vunpack.c.l.b16 %v106
    %v393 = vunpack.c.h.b16 %v106
    %v394 = vunpack.c.l.b16 %v107
    %v395 = vunpack.c.h.b16 %v107
    %v396 = vunpack.c.l.b16 %v108
    %v397 = vunpack.c.h.b16 %v108
    %v398 = vunpack.c.l.b16 %v109
    %v399 = vunpack.c.h.b16 %v109
    %v400 = vunpack.c.l.b16 %v110
    %v401 = vunpack.c.h.b16 %v110
    %v402 = vunpack.c.l.b16 %v111
    %v403 = vunpack.c.h.b16 %v111
    %v404 = vunpack.c.l.b16 %v112
    %v405 = vunpack.c.h.b16 %v112
    %v406 = vunpack.c.l.b16 %v113
    %v407 = vunpack.c.h.b16 %v113
    %v408 = vunpack.c.l.b16 %v114
    %v409 = vunpack.c.h.b16 %v114
    %v410 = vunpack.c.l.b16 %v115
    %v411 = vunpack.c.h.b16 %v115
    %v412 = vunpack.c.l.b16 %v116
    %v413 = vunpack.c.h.b16 %v116
    %v414 = vunpack.c.l.b16 %v117
    %v415 = vunpack.c.h.b16 %v117
    %v416 = vunpack.c.l.b16 %v118
    %v417 = vunpack.c.h.b16 %v118
    %v418 = vunpack.c.l.b16 %v119
    %v419 = vunpack.c.h.b16 %v119
    %v420 = vunpack.c.l.b16 %v120
    %v421 = vunpack.c.h.b16 %v120
    %v422 = vunpack.c.l.b16 %v121
    %v423 = vunpack.c.h.b16 %v121
    %v424 = vunpack.c.l.b16 %v122
    %v425 = vunpack.c.h.b16 %v122
    %v426 = vunpack.c.l.b16 %v123
    %v427 = vunpack.c.h.b16 %v123
    %v428 = vunpack.c.l.b16 %v124
    %v429 = vunpack.c.h.b16 %v124
    %v430 = vunpack.c.l.b16 %v125
    %v431 = vunpack.c.h.b16 %v125
    %v432 = vunpack.c.l.b16 %v126
    %v433 = vunpack.c.h.b16 %v126
    %v434 = vunpack.c.l.b16 %v127
    %v435 = vunpack.c.h.b16 %v127
    %v436 = vunpack.c.l.b16 %v128
    %v437 = vunpack.c.h.b16 %v128
    %v438 = vunpack.c.l.b16 %v129
    %v439 = vunpack.c.h.b16 %v129
    %v440 = vunpack.c.l.b16 %v130
    %v441 = vunpack.c.h.b16 %v130
    %v442 = vunpack.c.l.b16 %v131
    %v443 = vunpack.c.h.b16 %v131
    %v444 = vunpack.c.l.b16 %v132
    %v445 = vunpack.c.h.b16 %v132
    %v446 = vunpack.c.l.b16 %v133
    %v447 = vunpack.c.h.b16 %v133
    %v448 = vunpack.c.l.b16 %v134
    %v449 = vunpack.c.h.b16 %v134
    %v450 = vunpack.c.l.b16 %v135
    %v451 = vunpack.c.h.b16 %v135
    %v452 = vunpack.c.l.b16 %v136
    %v453 = vunpack.c.h.b16 %v136
    %v454 = vunpack.c.l.b16 %v137
    %v455 = vunpack.c.h.b16 %v137
    %v456 = vunpack.c.l.b16 %v138
    %v457 = vunpack.c.h.b16 %v138
    %v458 = vunpack.c.l.b16 %v139
    %v459 = vunpack.c.h.b16 %v139
    %v460 = vunpack.c.l.b16 %v140
    %v461 = vunpack.c.h.b16 %v140
    %v462 = vunpack.c.l.b16 %v141
    %v463 = vunpack.c.h.b16 %v141
    %v464 = vunpack.c.l.b16 %v142
    %v465 = vunpack.c.h.b16 %v142
    %v466 = vunpack.c.l.b16 %v143
    %v467 = vunpack.c.h.b16 %v143
    %v468 = vunpack.c.l.b16 %v144
    %v469 = vunpack.c.h.b16 %v144
    %v470 = vunpack.c.l.b16 %v145
    %v471 = vunpack.c.h.b16 %v145
    %v472 = vunpack.c.l.b16 %v146
    %v473 = vunpack.c.h.b16 %v146
    %v474 = vunpack.c.l.b16 %v147
    %v475 = vunpack.c.h.b16 %v147
    %v476 = vunpack.c.l.b16 %v148
    %v477 = vunpack.c.h.b16 %v148
    %v478 = vunpack.c.l.b16 %v149
    %v479 = vunpack.c.h.b16 %v149
    %v480 = vunpack.c.l.b16 %v150
    %v481 = vunpack.c.h.b16 %v150
    %v482 = vunpack.c.l.b16 %v151
    %v483 = vunpack.c.h.b16 %v151
    %v484 = vunpack.c.l.b16 %v152
    %v485 = vunpack.c.h.b16 %v152
    %v486 = vunpack.c.l.b16 %v153
    %v487 = vunpack.c.h.b16 %v153
    %v488 = vunpack.c.l.b16 %v154
    %v489 = vunpack.c.h.b16 %v154
    %v490 = vunpack.c.l.b16 %v155
    %v491 = vunpack.c.h.b16 %v155
    %v492 = vunpack.c.l.b16 %v156
    %v493 = vunpack.c.h.b16 %v156
    %v494 = vunpack.c.l.b16 %v157
    %v495 = vunpack.c.h.b16 %v157
    %v496 = vunpack.c.l.b16 %v158
    %v497 = vunpack.c.h.b16 %v158
    %v498 = vunpack.c.l.b16 %v159
    %v499 = vunpack.c.h.b16 %v159
    %v500 = vunpack.c.l.b16 %v160
    %v501 = vunpack.c.h.b16 %v160
    %v502 = vunpack.c.l.b16 %v161
    %v503 = vunpack.c.h.b16 %v161
    %v504 = vunpack.c.l.b16 %v162
    %v505 = vunpack.c.h.b16 %v162
    %v506 = vunpack.c.l.b16 %v163
    %v507 = vunpack.c.h.b16 %v163
    %v508 = vunpack.c.l.b16 %v164
    %v509 = vunpack.c.h.b16 %v164
    %v510 = vunpack.c.l.b16 %v165
    %v511 = vunpack.c.h.b16 %v165
    %v512 = vunpack.c.l.b16 %v166
    %v513 = vunpack.c.h.b16 %v166
    %v514 = vunpack.c.l.b16 %v167
    %v515 = vunpack.c.h.b16 %v167
    %v516 = vunpack.c.l.b16 %v168
    %v517 = vunpack.c.h.b16 %v168
    %v518 = vunpack.c.l.b16 %v169
    %v519 = vunpack.c.h.b16 %v169
    %v520 = vunpack.c.l.b16 %v170
    %v521 = vunpack.c.h.b16 %v170
    %v522 = vunpack.c.l.b16 %v171
    %v523 = vunpack.c.h.b16 %v171
    %v524 = vunpack.c.l.b16 %v172
    %v525 = vunpack.c.h.b16 %v172
    %v526 = vunpack.c.l.b16 %v173
    %v527 = vunpack.c.h.b16 %v173
    %v528 = vunpack.c.l.b16 %v174
    %v529 = vunpack.c.h.b16 %v174
    %v530 = vunpack.c.l.b16 %v175
    %v531 = vunpack.c.h.b16 %v175
    %v532 = vunpack.c.l.b16 %v176
    %v533 = vunpack.c.h.b16 %v176
    %v534 = vunpack.c.l.b16 %v177
    %v535 = vunpack.c.h.b16 %v177
    %v536 = vunpack.c.l.b16 %v178
    %v537 = vunpack.c.h.b16 %v178
    %v538 = vunpack.c.l.b16 %v179
    %v539 = vunpack.c.h.b16 %v179
    %v540 = vunpack.c.l.b16 %v180
    %v541 = vunpack.c.h.b16 %v180
    %v542 = vunpack.c.l.b16 %v181
    %v543 = vunpack.c.h.b16 %v181
    %v544 = vunpack.c.l.b16 %v182
    %v545 = vunpack.c.h.b16 %v182
    %v546 = vunpack.c.l.b16 %v183
    %v547 = vunpack.c.h.b16 %v183
    %v548 = vunpack.c.l.b16 %v184
    %v549 = vunpack.c.h.b16 %v184
    %v550 = vunpack.c.l.b16 %v185
    %v551 = vunpack.c.h.b16 %v185
    %v552 = vunpack.c.l.b16 %v186
    %v553 = vunpack.c.h.b16 %v186
    %v554 = vunpack.c.l.b16 %v187
    %v555 = vunpack.c.h.b16 %v187
    %v556 = vunpack.c.l.b16 %v188
    %v557 = vunpack.c.h.b16 %v188
    %v558 = vunpack.c.l.b16 %v189
    %v559 = vunpack.c.h.b16 %v189
    %v560 = vunpack.c.l.b16 %v190
    %v561 = vunpack.c.h.b16 %v190
    %v562 = vunpack.c.l.b16 %v191
    %v563 = vunpack.c.h.b16 %v191
    %v564 = vunpack.c.l.b16 %v192
    %v565 = vunpack.c.h.b16 %v192
    %v566 = vunpack.c.l.b16 %v193
    %v567 = vunpack.c.h.b16 %v193
    %v568 = vunpack.c.l.b16 %v194
    %v569 = vunpack.c.h.b16 %v194
    %v570 = vunpack.c.l.b16 %v195
    %v571 = vunpack.c.h.b16 %v195
    %v572 = vunpack.c.l.b16 %v196
    %v573 = vunpack.c.h.b16 %v196
    %v574 = vunpack.c.l.b16 %v197
    %v575 = vunpack.c.h.b16 %v197
    %v576 = vunpack.c.l.b16 %v198
    %v577 = vunpack.c.h.b16 %v198
    %v578 = vunpack.c.l.b16 %v199
    %v579 = vunpack.c.h.b16 %v199
    %v580 = vunpack.c.l.b16 %v200
    %v581 = vunpack.c.h.b16 %v200
    %v582 = vunpack.c.l.b16 %v201
    %v583 = vunpack.c.h.b16 %v201
    %v584 = vunpack.c.l.b16 %v202
    %v585 = vunpack.c.h.b16 %v202
    %v586 = vunpack.c.l.b16 %v203
    %v587 = vunpack.c.h.b16 %v203
    %v588 = vpack.c.b16 %v334, %v332
    %v589 = vpack.c.b16 %v335, %v333
    %v590 = vpack.c.b16 %v338, %v336
    %v591 = vpack.c.b16 %v339, %v337
    %v592 = vpack.c.b16 %v342, %v340
    %v593 = vpack.c.b16 %v343, %v341
    %v594 = vpack.c.b16 %v346, %v344
    %v595 = vpack.c.b16 %v347, %v345
    %v596 = vpack.c.b16 %v350, %v348
    %v597 = vpack.c.b16 %v351, %v349
    %v598 = vpack.c.b16 %v354, %v352
    %v599 = vpack.c.b16 %v355, %v353
    %v600 = vpack.c.b16 %v358, %v356
    %v601 = vpack.c.b16 %v359, %v357
    %v602 = vpack.c.b16 %v362, %v360
    %v603 = vpack.c.b16 %v363, %v361
    %v604 = vpack.c.b16 %v366, %v364
    %v605 = vpack.c.b16 %v367, %v365
    %v606 = vpack.c.b16 %v370, %v368
    %v607 = vpack.c.b16 %v371, %v369
    %v608 = vpack.c.b16 %v374, %v372
    %v609 = vpack.c.b16 %v375, %v373
    %v610 = vpack.c.b16 %v378, %v376
    %v611 = vpack.c.b16 %v379, %v377
    %v612 = vpack.c.b16 %v382, %v380
    %v613 = vpack.c.b16 %v383, %v381
    %v614 = vpack.c.b16 %v386, %v384
    %v615 = vpack.c.b16 %v387, %v385
    %v616 = vpack.c.b16 %v390, %v388
    %v617 = vpack.c.b16 %v391, %v389
    %v618 = vpack.c.b16 %v394, %v392
    %v619 = vpack.c.b16 %v395, %v393
    %v620 = vpack.c.b16 %v398, %v396
    %v621 = vpack.c.b16 %v399, %v397
    %v622 = vpack.c.b16 %v402, %v400
    %v623 = vpack.c.b16 %v403, %v401
    %v624 = vpack.c.b16 %v406, %v404
    %v625 = vpack.c.b16 %v407, %v405
    %v626 = vpack.c.b16 %v410, %v408
    %v627 = vpack.c.b16 %v411, %v409
    %v628 = vpack.c.b16 %v414, %v412
    %v629 = vpack.c.b16 %v415, %v413
    %v630 = vpack.c.b16 %v418, %v416
    %v631 = vpack.c.b16 %v419, %v417
    %v632 = vpack.c.b16 %v422, %v420
    %v633 = vpack.c.b16 %v423, %v421
    %v634 = vpack.c.b16 %v426, %v424
    %v635 = vpack.c.b16 %v427, %v425
    %v636 = vpack.c.b16 %v430, %v428
    %v637 = vpack.c.b16 %v431, %v429
    %v638 = vpack.c.b16 %v434, %v432
    %v639 = vpack.c.b16 %v435, %v433
    %v640 = vpack.c.b16 %v438, %v436
    %v641 = vpack.c.b16 %v439, %v437
    %v642 = vpack.c.b16 %v442, %v440
    %v643 = vpack.c.b16 %v443, %v441
    %v644 = vpack.c.b16 %v446, %v444
    %v645 = vpack.c.b16 %v447, %v445
    %v646 = vpack.c.b16 %v450, %v448
    %v647 = vpack.c.b16 %v451, %v449
    %v648 = vpack.c.b16 %v454, %v452
    %v649 = vpack.c.b16 %v455, %v453
    %v650 = vpack.c.b16 %v458, %v456
    %v651 = vpack.c.b16 %v459, %v457
    %v652 = vpack.c.b16 %v462, %v460
    %v653 = vpack.c.b16 %v463, %v461
    %v654 = vpack.c.b16 %v466, %v464
    %v655 = vpack.c.b16 %v467, %v465
    %v656 = vpack.c.b16 %v470, %v468
    %v657 = vpack.c.b16 %v471, %v469
    %v658 = vpack.c.b16 %v474, %v472
    %v659 = vpack.c.b16 %v475, %v473
    %v660 = vpack.c.b16 %v478, %v476
    %v661 = vpack.c.b16 %v479, %v477
    %v662 = vpack.c.b16 %v482, %v480
    %v663 = vpack.c.b16 %v483, %v481
    %v664 = vpack.c.b16 %v486, %v484
    %v665 = vpack.c.b16 %v487, %v485
    %v666 = vpack.c.b16 %v490, %v488
    %v667 = vpack.c.b16 %v491, %v489
    %v668 = vpack.c.b16 %v494, %v492
    %v669 = vpack.c.b16 %v495, %v493
    %v670 = vpack.c.b16 %v498, %v496
    %v671 = vpack.c.b16 %v499, %v497
    %v672 = vpack.c.b16 %v502, %v500
    %v673 = vpack.c.b16 %v503, %v501
    %v674 = vpack.c.b16 %v506, %v504
    %v675 = vpack.c.b16 %v507, %v505
    %v676 = vpack.c.b16 %v510, %v508
    %v677 = vpack.c.b16 %v511, %v509
    %v678 = vpack.c.b16 %v514, %v512
    %v679 = vpack.c.b16 %v515, %v513
    %v680 = vpack.c.b16 %v518, %v516
    %v681 = vpack.c.b16 %v519, %v517
    %v682 = vpack.c.b16 %v522, %v520
    %v683 = vpack.c.b16 %v523, %v521
    %v684 = vpack.c.b16 %v526, %v524
    %v685 = vpack.c.b16 %v527, %v525
    %v686 = vpack.c.b16 %v530, %v528
    %v687 = vpack.c.b16 %v531, %v529
    %v688 = vpack.c.b16 %v534, %v532
    %v689 = vpack.c.b16 %v535, %v533
    %v690 = vpack.c.b16 %v538, %v536
    %v691 = vpack.c.b16 %v539, %v537
    %v692 = vpack.c.b16 %v542, %v540
    %v693 = vpack.c.b16 %v543, %v541
    %v694 = vpack.c.b16 %v546, %v544
    %v695 = vpack.c.b16 %v547, %v545
    %v696 = vpack.c.b16 %v550, %v548
    %v697 = vpack.c.b16 %v551, %v549
    %v698 = vpack.c.b16 %v554, %v552
    %v699 = vpack.c.b16 %v555, %v553
    %v700 = vpack.c.b16 %v558, %v556
    %v701 = vpack.c.b16 %v559, %v557
    %v702 = vpack.c.b16 %v562, %v560
    %v703 = vpack.c.b16 %v563, %v561
    %v704 = vpack.c.b16 %v566, %v564
    %v705 = vpack.c.b16 %v567, %v565
    %v706 = vpack.c.b16 %v570, %v568
    %v707 = vpack.c.b16 %v571, %v569
    %v708 = vpack.c.b16 %v574, %v572
    %v709 = vpack.c.b16 %v575, %v573
    %v710 = vpack.c.b16 %v578, %v576
    %v711 = vpack.c.b16 %v579, %v577
    %v712 = vpack.c.b16 %v582, %v580
    %v713 = vpack.c.b16 %v583, %v581
    %v714 = vpack.c.b16 %v586, %v584
    %v715 = vpack.c.b16 %v587, %v585
    %844 = vmatprep.subr.bf16.mxu0 %v603
    %845 = vmatpush1.bf16.msra.mxu0 %v602
    %846 = vmatprep.subr.bf16.mxu0 %v601
    %847 = vmatpush1.bf16.msra.mxu0 %v600
    %848 = vmatprep.subr.bf16.mxu0 %v599
    %849 = vmatpush1.bf16.msra.mxu0 %v598
    %850 = vmatprep.subr.bf16.mxu0 %v597
    %851 = vmatpush1.bf16.msra.mxu0 %v596
    %852 = vmatprep.subr.bf16.mxu0 %v595
    %853 = vmatpush1.bf16.msra.mxu0 %v594
    %854 = vmatprep.subr.bf16.mxu0 %v593
    %855 = vmatpush1.bf16.msra.mxu0 %v592
    %856 = vmatprep.subr.bf16.mxu0 %v591
    %857 = vmatpush1.bf16.msra.mxu0 %v590
    %858 = vmatprep.subr.bf16.mxu0 %v589
    %859 = vmatpush1.bf16.msra.mxu0 %v588
    %860 = vmatprep.subr.bf16.mxu0 %v619
    %861 = vmatpush2.bf16.msra.mxu0 %v618
    %862 = vmatprep.subr.bf16.mxu0 %v617
    %863 = vmatpush2.bf16.msra.mxu0 %v616
    %864 = vmatprep.subr.bf16.mxu0 %v615
    %865 = vmatpush2.bf16.msra.mxu0 %v614
    %866 = vmatprep.subr.bf16.mxu0 %v613
    %867 = vmatpush2.bf16.msra.mxu0 %v612
    %868 = vmatprep.subr.bf16.mxu0 %v611
    %869 = vmatpush2.bf16.msra.mxu0 %v610
    %870 = vmatprep.subr.bf16.mxu0 %v609
    %871 = vmatpush2.bf16.msra.mxu0 %v608
    %872 = vmatprep.subr.bf16.mxu0 %v607
    %873 = vmatpush2.bf16.msra.mxu0 %v606
    %874 = vmatprep.subr.bf16.mxu0 %v605
    %875 = vmatpush2.bf16.msra.mxu0 %v604
    %876 = vmatprep.mubr.bf16.mxu0 %v69
    %877 = vmatmul.mubr.bf16.gmra.mxu0 %v68
    %v878 = vpop.f32.mrf.mxu0
    %v879 = vadd.f32 0.0, %v878
    %v880 = vpop.f32.mrf.mxu0
    %v881 = vadd.f32 0.0, %v880
    %v882 = vpop.f32.mrf.mxu0
    %v883 = vpop.f32.mrf.mxu0
    %884 = vdwg.mxu0
    %885 = vmatprep.subr.bf16.mxu0 %v635
    %886 = vmatpush1.bf16.msra.mxu0 %v634
    %887 = vmatprep.subr.bf16.mxu0 %v633
    %888 = vmatpush1.bf16.msra.mxu0 %v632
    %889 = vmatprep.subr.bf16.mxu0 %v631
    %890 = vmatpush1.bf16.msra.mxu0 %v630
    %891 = vmatprep.subr.bf16.mxu0 %v629
    %892 = vmatpush1.bf16.msra.mxu0 %v628
    %893 = vmatprep.subr.bf16.mxu0 %v627
    %894 = vmatpush1.bf16.msra.mxu0 %v626
    %895 = vmatprep.subr.bf16.mxu0 %v625
    %896 = vmatpush1.bf16.msra.mxu0 %v624
    %897 = vmatprep.subr.bf16.mxu0 %v623
    %898 = vmatpush1.bf16.msra.mxu0 %v622
    %899 = vmatprep.subr.bf16.mxu0 %v621
    %900 = vmatpush1.bf16.msra.mxu0 %v620
    %901 = vmatprep.subr.bf16.mxu0 %v651
    %902 = vmatpush2.bf16.msra.mxu0 %v650
    %903 = vmatprep.subr.bf16.mxu0 %v649
    %904 = vmatpush2.bf16.msra.mxu0 %v648
    %905 = vmatprep.subr.bf16.mxu0 %v647
    %906 = vmatpush2.bf16.msra.mxu0 %v646
    %907 = vmatprep.subr.bf16.mxu0 %v645
    %908 = vmatpush2.bf16.msra.mxu0 %v644
    %909 = vmatprep.subr.bf16.mxu0 %v643
    %910 = vmatpush2.bf16.msra.mxu0 %v642
    %911 = vmatprep.subr.bf16.mxu0 %v641
    %912 = vmatpush2.bf16.msra.mxu0 %v640
    %913 = vmatprep.subr.bf16.mxu0 %v639
    %914 = vmatpush2.bf16.msra.mxu0 %v638
    %915 = vmatprep.subr.bf16.mxu0 %v637
    %916 = vmatpush2.bf16.msra.mxu0 %v636
    %917 = vmatprep.mubr.bf16.mxu0 %v71
    %918 = vmatmul.mubr.bf16.gmra.mxu0 %v70
    %v919 = vpop.f32.mrf.mxu0
    %v920 = vadd.f32 %v879, %v919
    %v921 = vpop.f32.mrf.mxu0
    %v922 = vadd.f32 %v881, %v921
    %v923 = vpop.f32.mrf.mxu0
    %v924 = vpop.f32.mrf.mxu0
    %925 = vdwg.mxu0
    %926 = vmatprep.subr.bf16.mxu0 %v667
    %927 = vmatpush1.bf16.msra.mxu0 %v666
    %928 = vmatprep.subr.bf16.mxu0 %v665
    %929 = vmatpush1.bf16.msra.mxu0 %v664
    %930 = vmatprep.subr.bf16.mxu0 %v663
    %931 = vmatpush1.bf16.msra.mxu0 %v662
    %932 = vmatprep.subr.bf16.mxu0 %v661
    %933 = vmatpush1.bf16.msra.mxu0 %v660
    %934 = vmatprep.subr.bf16.mxu0 %v659
    %935 = vmatpush1.bf16.msra.mxu0 %v658
    %936 = vmatprep.subr.bf16.mxu0 %v657
    %937 = vmatpush1.bf16.msra.mxu0 %v656
    %938 = vmatprep.subr.bf16.mxu0 %v655
    %939 = vmatpush1.bf16.msra.mxu0 %v654
    %940 = vmatprep.subr.bf16.mxu0 %v653
    %941 = vmatpush1.bf16.msra.mxu0 %v652
    %942 = vmatprep.subr.bf16.mxu0 %v683
    %943 = vmatpush2.bf16.msra.mxu0 %v682
    %944 = vmatprep.subr.bf16.mxu0 %v681
    %945 = vmatpush2.bf16.msra.mxu0 %v680
    %946 = vmatprep.subr.bf16.mxu0 %v679
    %947 = vmatpush2.bf16.msra.mxu0 %v678
    %948 = vmatprep.subr.bf16.mxu0 %v677
    %949 = vmatpush2.bf16.msra.mxu0 %v676
    %950 = vmatprep.subr.bf16.mxu0 %v675
    %951 = vmatpush2.bf16.msra.mxu0 %v674
    %952 = vmatprep.subr.bf16.mxu0 %v673
    %953 = vmatpush2.bf16.msra.mxu0 %v672
    %954 = vmatprep.subr.bf16.mxu0 %v671
    %955 = vmatpush2.bf16.msra.mxu0 %v670
    %956 = vmatprep.subr.bf16.mxu0 %v669
    %957 = vmatpush2.bf16.msra.mxu0 %v668
    %958 = vmatprep.mubr.bf16.mxu0 %v73
    %959 = vmatmul.mubr.bf16.gmra.mxu0 %v72
    %v960 = vpop.f32.mrf.mxu0
    %v961 = vadd.f32 %v920, %v960
    %v962 = vpop.f32.mrf.mxu0
    %v963 = vadd.f32 %v922, %v962
    %v964 = vpop.f32.mrf.mxu0
    %v965 = vpop.f32.mrf.mxu0
    %966 = vdwg.mxu0
    %967 = vmatprep.subr.bf16.mxu0 %v699
    %968 = vmatpush1.bf16.msra.mxu0 %v698
    %969 = vmatprep.subr.bf16.mxu0 %v697
    %970 = vmatpush1.bf16.msra.mxu0 %v696
    %971 = vmatprep.subr.bf16.mxu0 %v695
    %972 = vmatpush1.bf16.msra.mxu0 %v694
    %973 = vmatprep.subr.bf16.mxu0 %v693
    %974 = vmatpush1.bf16.msra.mxu0 %v692
    %975 = vmatprep.subr.bf16.mxu0 %v691
    %976 = vmatpush1.bf16.msra.mxu0 %v690
    %977 = vmatprep.subr.bf16.mxu0 %v689
    %978 = vmatpush1.bf16.msra.mxu0 %v688
    %979 = vmatprep.subr.bf16.mxu0 %v687
    %980 = vmatpush1.bf16.msra.mxu0 %v686
    %981 = vmatprep.subr.bf16.mxu0 %v685
    %982 = vmatpush1.bf16.msra.mxu0 %v684
    %983 = vmatprep.subr.bf16.mxu0 %v715
    %984 = vmatpush2.bf16.msra.mxu0 %v714
    %985 = vmatprep.subr.bf16.mxu0 %v713
    %986 = vmatpush2.bf16.msra.mxu0 %v712
    %987 = vmatprep.subr.bf16.mxu0 %v711
    %988 = vmatpush2.bf16.msra.mxu0 %v710
    %989 = vmatprep.subr.bf16.mxu0 %v709
    %990 = vmatpush2.bf16.msra.mxu0 %v708
    %991 = vmatprep.subr.bf16.mxu0 %v707
    %992 = vmatpush2.bf16.msra.mxu0 %v706
    %993 = vmatprep.subr.bf16.mxu0 %v705
    %994 = vmatpush2.bf16.msra.mxu0 %v704
    %995 = vmatprep.subr.bf16.mxu0 %v703
    %996 = vmatpush2.bf16.msra.mxu0 %v702
    %997 = vmatprep.subr.bf16.mxu0 %v701
    %998 = vmatpush2.bf16.msra.mxu0 %v700
    %999 = vmatprep.mubr.bf16.mxu0 %v75
    %1000 = vmatmul.mubr.bf16.gmra.mxu0 %v74
    %v1001 = vpop.f32.mrf.mxu0
    %v1002 = vadd.f32 %v961, %v1001
    %v1003 = vpop.f32.mrf.mxu0
    %v1004 = vadd.f32 %v963, %v1003
    %v1005 = vpop.f32.mrf.mxu0
    %v1006 = vpop.f32.mrf.mxu0
    %1007 = vdwg.mxu0
    %v1008 = vmax.f32 %v1002, 0.0
    %v1009 = vmax.f32 %v1004, 0.0
    %v1010 = vpack.c.bf16 %v1008, %v1008
    %v1011 = vpack.c.bf16 %v1009, %v1009
    %v1012 = vld [vmem:[#allocation9] sm:$0xf]
    %v1013 = vld [vmem:[#allocation9 + $0x4] sm:$0xf]
    %v1014 = vld [vmem:[#allocation9 + $0x8] sm:$0xf]
    %v1015 = vld [vmem:[#allocation9 + $0xc] sm:$0xf]
    %v1016 = vld [vmem:[#allocation9 + $0x10] sm:$0xf]
    %v1017 = vld [vmem:[#allocation9 + $0x14] sm:$0xf]
    %v1018 = vld [vmem:[#allocation9 + $0x18] sm:$0xf]
    %v1019 = vld [vmem:[#allocation9 + $0x1c] sm:$0xf]
    %v1020 = vld [vmem:[#allocation9 + $0x20] sm:$0xf]
    %v1021 = vld [vmem:[#allocation9 + $0x24] sm:$0xf]
    %v1022 = vld [vmem:[#allocation9 + $0x28] sm:$0xf]
    %v1023 = vld [vmem:[#allocation9 + $0x2c] sm:$0xf]
    %v1024 = vld [vmem:[#allocation9 + $0x30] sm:$0xf]
    %v1025 = vld [vmem:[#allocation9 + $0x34] sm:$0xf]
    %v1026 = vld [vmem:[#allocation9 + $0x38] sm:$0xf]
    %v1027 = vld [vmem:[#allocation9 + $0x3c] sm:$0xf]
    %v1028 = vld [vmem:[#allocation9 + $0x40] sm:$0xf]
    %v1029 = vld [vmem:[#allocation9 + $0x44] sm:$0xf]
    %v1030 = vld [vmem:[#allocation9 + $0x48] sm:$0xf]
    %v1031 = vld [vmem:[#allocation9 + $0x4c] sm:$0xf]
    %v1032 = vld [vmem:[#allocation9 + $0x50] sm:$0xf]
    %v1033 = vld [vmem:[#allocation9 + $0x54] sm:$0xf]
    %v1034 = vld [vmem:[#allocation9 + $0x58] sm:$0xf]
    %v1035 = vld [vmem:[#allocation9 + $0x5c] sm:$0xf]
    %v1036 = vld [vmem:[#allocation9 + $0x60] sm:$0xf]
    %v1037 = vld [vmem:[#allocation9 + $0x64] sm:$0xf]
    %v1038 = vld [vmem:[#allocation9 + $0x68] sm:$0xf]
    %v1039 = vld [vmem:[#allocation9 + $0x6c] sm:$0xf]
    %v1040 = vld [vmem:[#allocation9 + $0x70] sm:$0xf]
    %v1041 = vld [vmem:[#allocation9 + $0x74] sm:$0xf]
    %v1042 = vld [vmem:[#allocation9 + $0x78] sm:$0xf]
    %v1043 = vld [vmem:[#allocation9 + $0x7c] sm:$0xf]
    %v1044 = vld [vmem:[%s4] sm:$0x1]
    %v1046 = vlaneseq
    %v1047 = vshrl.u32 %v1046, 7
    %v1048 = vsub.s32 0, %v1047
    %v1049 = vrot.slane %v1044, %v1048
    %v1083 = vunpack.c.l.b16 %v1012
    %v1084 = vunpack.c.l.b16 %v1013
    %v1085 = vunpack.c.l.b16 %v1014
    %v1086 = vunpack.c.l.b16 %v1015
    %v1087 = vunpack.c.l.b16 %v1016
    %v1088 = vunpack.c.l.b16 %v1017
    %v1089 = vunpack.c.l.b16 %v1018
    %v1090 = vunpack.c.l.b16 %v1019
    %v1091 = vunpack.c.l.b16 %v1020
    %v1092 = vunpack.c.l.b16 %v1021
    %v1093 = vunpack.c.l.b16 %v1022
    %v1094 = vunpack.c.l.b16 %v1023
    %v1095 = vunpack.c.l.b16 %v1024
    %v1096 = vunpack.c.l.b16 %v1025
    %v1097 = vunpack.c.l.b16 %v1026
    %v1098 = vunpack.c.l.b16 %v1027
    %v1099 = vunpack.c.l.b16 %v1028
    %v1100 = vunpack.c.l.b16 %v1029
    %v1101 = vunpack.c.l.b16 %v1030
    %v1102 = vunpack.c.l.b16 %v1031
    %v1103 = vunpack.c.l.b16 %v1032
    %v1104 = vunpack.c.l.b16 %v1033
    %v1105 = vunpack.c.l.b16 %v1034
    %v1106 = vunpack.c.l.b16 %v1035
    %v1107 = vunpack.c.l.b16 %v1036
    %v1108 = vunpack.c.l.b16 %v1037
    %v1109 = vunpack.c.l.b16 %v1038
    %v1110 = vunpack.c.l.b16 %v1039
    %v1111 = vunpack.c.l.b16 %v1040
    %v1112 = vunpack.c.l.b16 %v1041
    %v1113 = vunpack.c.l.b16 %v1042
    %v1114 = vunpack.c.l.b16 %v1043
    %v1115 = vpack.c.b16 %v1084, %v1083
    %v1116 = vpack.c.b16 %v1086, %v1085
    %v1117 = vpack.c.b16 %v1088, %v1087
    %v1118 = vpack.c.b16 %v1090, %v1089
    %v1119 = vpack.c.b16 %v1092, %v1091
    %v1120 = vpack.c.b16 %v1094, %v1093
    %v1121 = vpack.c.b16 %v1096, %v1095
    %v1122 = vpack.c.b16 %v1098, %v1097
    %v1123 = vpack.c.b16 %v1100, %v1099
    %v1124 = vpack.c.b16 %v1102, %v1101
    %v1125 = vpack.c.b16 %v1104, %v1103
    %v1126 = vpack.c.b16 %v1106, %v1105
    %v1127 = vpack.c.b16 %v1108, %v1107
    %v1128 = vpack.c.b16 %v1110, %v1109
    %v1129 = vpack.c.b16 %v1112, %v1111
    %v1130 = vpack.c.b16 %v1114, %v1113
    %1147 = vmatprep.subr.bf16.mxu0 0
    %1148 = vmatpush1.bf16.msra.mxu0 %v1122
    %1149 = vmatprep.subr.bf16.mxu0 0
    %1150 = vmatpush1.bf16.msra.mxu0 %v1121
    %1151 = vmatprep.subr.bf16.mxu0 0
    %1152 = vmatpush1.bf16.msra.mxu0 %v1120
    %1153 = vmatprep.subr.bf16.mxu0 0
    %1154 = vmatpush1.bf16.msra.mxu0 %v1119
    %1155 = vmatprep.subr.bf16.mxu0 0
    %1156 = vmatpush1.bf16.msra.mxu0 %v1118
    %1157 = vmatprep.subr.bf16.mxu0 0
    %1158 = vmatpush1.bf16.msra.mxu0 %v1117
    %1159 = vmatprep.subr.bf16.mxu0 0
    %1160 = vmatpush1.bf16.msra.mxu0 %v1116
    %1161 = vmatprep.subr.bf16.mxu0 0
    %1162 = vmatpush1.bf16.msra.mxu0 %v1115
    %1163 = vmatprep.subr.bf16.mxu0 0
    %1164 = vmatpush2.bf16.msra.mxu0 %v1130
    %1165 = vmatprep.subr.bf16.mxu0 0
    %1166 = vmatpush2.bf16.msra.mxu0 %v1129
    %1167 = vmatprep.subr.bf16.mxu0 0
    %1168 = vmatpush2.bf16.msra.mxu0 %v1128
    %1169 = vmatprep.subr.bf16.mxu0 0
    %1170 = vmatpush2.bf16.msra.mxu0 %v1127
    %1171 = vmatprep.subr.bf16.mxu0 0
    %1172 = vmatpush2.bf16.msra.mxu0 %v1126
    %1173 = vmatprep.subr.bf16.mxu0 0
    %1174 = vmatpush2.bf16.msra.mxu0 %v1125
    %1175 = vmatprep.subr.bf16.mxu0 0
    %1176 = vmatpush2.bf16.msra.mxu0 %v1124
    %1177 = vmatprep.subr.bf16.mxu0 0
    %1178 = vmatpush2.bf16.msra.mxu0 %v1123
    %1179 = vmatprep.mubr.bf16.mxu0 %v1011
    %1180 = vmatmul.mubr.bf16.gmra.mxu0 %v1010
    %v1181 = vpop.f32.mrf.mxu0
    %v1182 = vadd.f32 %v1049, %v1181
    %v1183 = vpop.f32.mrf.mxu0
    %v1184 = vpop.f32.mrf.mxu0
    %v1185 = vpop.f32.mrf.mxu0
    %1186 = vdwg.mxu0
    %1187 = vst [vmem:[#allocation10] sm:$0xff] %v1182
    // Predicated region
    $region30: #{tpu_custom_call.1} parent=1 // pred_check
      _
    $region31: #{tpu_custom_call.1} parent=1 // pred_check_branch
      %1189 = sbr.rel (0) target = $region33
    $region32: #{tpu_custom_call.1} parent=1 // pred_region
      %s1191 = ssub.s32 128, 128
      %1192 = vsyncadd [#allocation6], %s1191
      %s1194 = sshll.u32 [#allocation10], 4
      %s1195 = int_to_ptr.vmem [resolvable:$true] %s1194
      %1197 = dma.vmem_to_hbm [thread:$0]  %s1195, 128, %s5, [#allocation6]
    $region33: #{tpu_custom_call.1} parent=1 // pred_fallthru
      _
    // Predicated region
    $region34: #{tpu_custom_call.1} parent=1 // pred_check
      _
    $region35: #{tpu_custom_call.1} parent=1 // pred_check_branch
      %1199 = sbr.rel (0) target = $region37
    $region36: #{tpu_custom_call.1} parent=1 // pred_region
      %1200 = dma.done [#allocation6], 128
    $region37: #{tpu_custom_call.1} parent=1 // pred_fallthru
      _
    %1201 = vsyncpa [#allocation5], 1
    %1202 = vsyncpa [#allocation8], 1
    %1203 = vsyncpa [#allocation6], 1

</llo_original>
